<compile_context>
chip_gen: v5e
topology: v5e:2x2
jax: 0.10.0
libtpu: 0.0.40
codegen_flags: <defaults>
</compile_context>

<pallas_src>
import jax
import jax.numpy as jnp
from jax.experimental import pallas as pl
from jax.experimental.pallas import tpu as pltpu

FC1_UNITS = 512
FC2_UNITS = 256
FC3_UNITS = 64
FC4_UNITS = 16

LANE = 128
SUBLANE_F32 = 8
SUBLANE_BF16 = 16


def _round_up(n, m):
    return ((n + m - 1) // m) * m


def _choose_batch_tile(B):
    """Adaptive M tile: tiny batches pad only to the f32 sublane (8); bigger
    batches use MXU-friendly 128/256-row tiles (>=2 grid steps past 128 rows
    so megacore/"parallel" can split work on v7x)."""
    if B <= 128:
        return _round_up(max(B, 1), SUBLANE_F32)
    if B <= 512:
        return 128
    return 256


def actor_kernel(x_ref,
                 w1_ref, b1_ref,
                 w2_ref, b2_ref,
                 w3_ref, b3_ref,
                 w4_ref, b4_ref,
                 w5_ref, b5_ref,
                 out_ref):
    # fc1 -> relu   (bf16 MXU operands, f32 accumulation, f32 elementwise)
    h = jnp.dot(x_ref[...].astype(jnp.bfloat16), w1_ref[...],
                preferred_element_type=jnp.float32)
    h = jnp.maximum(h + b1_ref[...], 0.0)
    # fc2 -> relu
    h = jnp.dot(h.astype(jnp.bfloat16), w2_ref[...],
                preferred_element_type=jnp.float32)
    h = jnp.maximum(h + b2_ref[...], 0.0)
    # fc3 -> relu (64 out lanes, unpadded -- VMEM-internal only)
    h = jnp.dot(h.astype(jnp.bfloat16), w3_ref[...],
                preferred_element_type=jnp.float32)
    h = jnp.maximum(h + b3_ref[...], 0.0)
    # fc4 -> relu (16 out lanes, unpadded -- VMEM-internal only)
    h = jnp.dot(h.astype(jnp.bfloat16), w4_ref[...],
                preferred_element_type=jnp.float32)
    h = jnp.maximum(h + b4_ref[...], 0.0)
    # fc5 -> tanh (out padded to 128 lanes so the HBM store is lane-dense)
    h = jnp.dot(h.astype(jnp.bfloat16), w5_ref[...],
                preferred_element_type=jnp.float32)
    out_ref[...] = jnp.tanh(h + b5_ref[...])


def actor_forward(x, padded_params, action_size):
    """x: (B, state_size) f32.
    padded_params: list of (W bf16 (fin_p, fout_p), b f32 (1, fout_p))."""
    B, S = x.shape
    s_pad = padded_params[0][0].shape[0]
    out_pad = padded_params[-1][0].shape[1]

    tile = _choose_batch_tile(B)
    b_pad = _round_up(B, tile)

    # Pad only the batch/state tail (single lax.pad); padded lanes/rows are
    # exact zeros so they are a no-op through the net.  No full zero-copy.
    if b_pad != B or s_pad != S:
        x_in = jnp.pad(x, ((0, b_pad - B), (0, s_pad - S)))
    else:
        x_in = x

    flat = [x_in]
    for w, b in padded_params:
        flat.append(w)
        flat.append(b)

    grid = (b_pad // tile,)

    in_specs = [pl.BlockSpec((tile, s_pad), lambda i: (i, 0))]
    for w, b in padded_params:
        # Constant index_map: weights/biases stay VMEM-resident across steps.
        in_specs.append(pl.BlockSpec(w.shape, lambda i: (0, 0)))
        in_specs.append(pl.BlockSpec(b.shape, lambda i: (0, 0)))
    out_specs = pl.BlockSpec((tile, out_pad), lambda i: (i, 0))

    # Advisory cost estimate (actual padded dims).
    layer_dims = [s_pad] + [w.shape[1] for w, _ in padded_params]
    flops = sum(2 * b_pad * a * c for a, c in zip(layer_dims[:-1], layer_dims[1:]))
    bytes_accessed = (
        int(x_in.size) * 4
        + sum(int(w.size) * w.dtype.itemsize + int(b.size) * 4
              for w, b in padded_params)
        + b_pad * out_pad * 4)

    out = pl.pallas_call(
        actor_kernel,
        out_shape=jax.ShapeDtypeStruct((b_pad, out_pad), jnp.float32),
        grid=grid,
        in_specs=in_specs,
        out_specs=out_specs,
        compiler_params=pltpu.CompilerParams(
            dimension_semantics=("parallel",)),
        cost_estimate=pl.CostEstimate(
            flops=int(flops),
            transcendentals=int(b_pad * out_pad),
            bytes_accessed=int(bytes_accessed)),
    )(*flat)
    return out[:B, :action_size]


def init_actor_params(key, state_size, action_size):
    """Deterministic init mirroring the PyTorch module's reset_parameters.

    PyTorch's hidden_init uses fan = weight.size()[0] (output dim of the layer
    as stored (out, in)) -> lim = 1/sqrt(fan_out); biases keep nn.Linear's
    default uniform(+-1/sqrt(in)).  Returns unpadded f32 params, W as (in,out).
    """
    dims = [state_size, FC1_UNITS, FC2_UNITS, FC3_UNITS, FC4_UNITS, action_size]
    params = []
    keys = jax.random.split(key, len(dims) - 1)
    for i, k in enumerate(keys):
        fan_in, fan_out = dims[i], dims[i + 1]
        if i < len(keys) - 1:
            lim = 1.0 / jnp.sqrt(jnp.float32(fan_out))  # matches hidden_init quirk
        else:
            lim = 0.003
        kw, kb = jax.random.split(k)
        w = jax.random.uniform(kw, (fan_in, fan_out), jnp.float32,
                               minval=-lim, maxval=lim)
        blim = 1.0 / jnp.sqrt(jnp.float32(fan_in))
        b = jax.random.uniform(kb, (1, fan_out), jnp.float32,
                               minval=-blim, maxval=blim)
        params.append((w, b))
    return params


def pad_params(raw_params):
    """Pad feature dims minimally and consistently (done once, off the hot path):
      * every K / hidden dim -> multiple of 16 (bf16 sublane packing only),
      * final out dim -> multiple of 128 (lane-dense HBM store).
    Padded entries are exact zeros.  Weights cast to bf16, biases stay f32."""
    n = len(raw_params)
    dims = [raw_params[0][0].shape[0]] + [w.shape[1] for w, _ in raw_params]
    pdims = [_round_up(d, SUBLANE_BF16) for d in dims[:-1]]
    pdims.append(_round_up(dims[-1], LANE))
    padded = []
    for i, (w, b) in enumerate(raw_params):
        fin, fout = w.shape
        fin_p, fout_p = pdims[i], pdims[i + 1]
        w_p = (jnp.zeros((fin_p, fout_p), jnp.float32)
               .at[:fin, :fout].set(w).astype(jnp.bfloat16))
        b_p = jnp.zeros((1, fout_p), jnp.float32).at[:, :fout].set(
            b.reshape(1, -1))
        padded.append((w_p, b_p))
    return padded


def actor_reference_bf16(x, padded_params, action_size):
    """Pure-JAX reference mimicking the kernel's padded bf16 math exactly."""
    B, S = x.shape
    s_pad = padded_params[0][0].shape[0]
    h = jnp.pad(x, ((0, 0), (0, s_pad - S)))
    n = len(padded_params)
    for i, (w, b) in enumerate(padded_params):
        h = jnp.dot(h.astype(jnp.bfloat16), w,
                    preferred_element_type=jnp.float32) + b
        h = jnp.maximum(h, 0.0) if i < n - 1 else jnp.tanh(h)
    return h[:, :action_size]


def actor_reference_f32(x, raw_params):
    """Full-precision reference with the original (unpadded) f32 params."""
    h = x
    n = len(raw_params)
    for i, (w, b) in enumerate(raw_params):
        h = h @ w + b
        h = jnp.maximum(h, 0.0) if i < n - 1 else jnp.tanh(h)
    return h


if __name__ == "__main__":
    key = jax.random.PRNGKey(0)
    kx, kx2, kp = jax.random.split(key, 3)

    state_size = 32
    action_size = 8
    raw_params = init_actor_params(kp, state_size, action_size)
    padded_params = pad_params(raw_params)

    # --- small / inference-sized batch (single 8-row grid step) ---
    batch = 8
    x = jax.random.normal(kx, (batch, state_size), jnp.float32)
    out = jax.block_until_ready(actor_forward(x, padded_params, action_size))
    assert out.shape == (batch, action_size)
    ref_bf16 = actor_reference_bf16(x, padded_params, action_size)
    assert jnp.allclose(out, ref_bf16, atol=1e-2, rtol=1e-2), \
        "small-batch mismatch vs bf16 reference"
    ref_f32 = actor_reference_f32(x, raw_params)
    assert jnp.allclose(out, ref_f32, atol=1e-1, rtol=1e-1), \
        "small-batch mismatch vs f32 reference"

    # --- medium batch with a ragged tail (exercises 128-row tiles, grid>1) ---
    batch2 = 200
    x2 = jax.random.normal(kx2, (batch2, state_size), jnp.float32)
    out2 = jax.block_until_ready(actor_forward(x2, padded_params, action_size))
    assert out2.shape == (batch2, action_size)
    ref2_bf16 = actor_reference_bf16(x2, padded_params, action_size)
    assert jnp.allclose(out2, ref2_bf16, atol=1e-2, rtol=1e-2), \
        "medium-batch mismatch vs bf16 reference"
    ref2_f32 = actor_reference_f32(x2, raw_params)
    assert jnp.allclose(out2, ref2_f32, atol=1e-1, rtol=1e-1), \
        "medium-batch mismatch vs f32 reference"

    print("KERNEL_OK")
</pallas_src>

<mosaic_0001>
module attributes {stable_mosaic.version = 11 : i64} {
  func.func @actor_kernel(%arg0: i32, %arg1: memref<8x32xf32, #tpu.memory_space<vmem>>, %arg2: memref<32x512xbf16, #tpu.memory_space<vmem>>, %arg3: memref<1x512xf32, #tpu.memory_space<vmem>>, %arg4: memref<512x256xbf16, #tpu.memory_space<vmem>>, %arg5: memref<1x256xf32, #tpu.memory_space<vmem>>, %arg6: memref<256x64xbf16, #tpu.memory_space<vmem>>, %arg7: memref<1x64xf32, #tpu.memory_space<vmem>>, %arg8: memref<64x16xbf16, #tpu.memory_space<vmem>>, %arg9: memref<1x16xf32, #tpu.memory_space<vmem>>, %arg10: memref<16x128xbf16, #tpu.memory_space<vmem>>, %arg11: memref<1x128xf32, #tpu.memory_space<vmem>>, %arg12: memref<8x128xf32, #tpu.memory_space<vmem>>) attributes {dimension_semantics = [#tpu.dimension_semantics<parallel>], iteration_bounds = array<i64: 1>, scalar_prefetch = 0 : i64, scratch_operands = 0 : i64, tpu.core_type = #tpu.core_type<tc>, window_params = [{transform_indices = @transform_0, window_bounds = array<i64: 8, 32>}, {pipeline_mode = #tpu.pipeline_mode<synchronous>, transform_indices = @transform_1, window_bounds = array<i64: 32, 512>}, {pipeline_mode = #tpu.pipeline_mode<synchronous>, transform_indices = @transform_2, window_bounds = array<i64: 1, 512>}, {pipeline_mode = #tpu.pipeline_mode<synchronous>, transform_indices = @transform_3, window_bounds = array<i64: 512, 256>}, {pipeline_mode = #tpu.pipeline_mode<synchronous>, transform_indices = @transform_4, window_bounds = array<i64: 1, 256>}, {pipeline_mode = #tpu.pipeline_mode<synchronous>, transform_indices = @transform_5, window_bounds = array<i64: 256, 64>}, {pipeline_mode = #tpu.pipeline_mode<synchronous>, transform_indices = @transform_6, window_bounds = array<i64: 1, 64>}, {pipeline_mode = #tpu.pipeline_mode<synchronous>, transform_indices = @transform_7, window_bounds = array<i64: 64, 16>}, {pipeline_mode = #tpu.pipeline_mode<synchronous>, transform_indices = @transform_8, window_bounds = array<i64: 1, 16>}, {pipeline_mode = #tpu.pipeline_mode<synchronous>, transform_indices = @transform_9, window_bounds = array<i64: 16, 128>}, {pipeline_mode = #tpu.pipeline_mode<synchronous>, transform_indices = @transform_10, window_bounds = array<i64: 1, 128>}, {transform_indices = @transform_11, window_bounds = array<i64: 8, 128>}]} {
    %c0 = arith.constant 0 : index
    %c0_0 = arith.constant 0 : index
    %0 = vector.load %arg1[%c0, %c0_0] : memref<8x32xf32, #tpu.memory_space<vmem>>, vector<8x32xf32>
    %1 = arith.truncf %0 : vector<8x32xf32> to vector<8x32xbf16>
    %c0_1 = arith.constant 0 : index
    %c0_2 = arith.constant 0 : index
    %2 = vector.load %arg2[%c0_1, %c0_2] : memref<32x512xbf16, #tpu.memory_space<vmem>>, vector<32x512xbf16>
    %cst = arith.constant dense<0.000000e+00> : vector<8x512xf32>
    %3 = tpu.matmul %1, %2, %cst {dimension_numbers = #tpu.dot_dimension_numbers<[1], [0], [0], [1], [0, 0, 1, 1], [], []>} : vector<8x32xbf16>, vector<32x512xbf16>, vector<8x512xf32> -> vector<8x512xf32>
    %c0_3 = arith.constant 0 : index
    %c0_4 = arith.constant 0 : index
    %4 = vector.load %arg3[%c0_3, %c0_4] : memref<1x512xf32, #tpu.memory_space<vmem>>, vector<1x512xf32>
    %5 = vector.broadcast %4 : vector<1x512xf32> to vector<8x512xf32>
    %6 = arith.addf %3, %5 : vector<8x512xf32>
    %cst_5 = arith.constant 0.000000e+00 : f32
    %7 = vector.broadcast %cst_5 : f32 to vector<8x512xf32>
    %8 = arith.maximumf %6, %7 : vector<8x512xf32>
    %9 = arith.truncf %8 : vector<8x512xf32> to vector<8x512xbf16>
    %c0_6 = arith.constant 0 : index
    %c0_7 = arith.constant 0 : index
    %10 = vector.load %arg4[%c0_6, %c0_7] : memref<512x256xbf16, #tpu.memory_space<vmem>>, vector<512x256xbf16>
    %cst_8 = arith.constant dense<0.000000e+00> : vector<8x256xf32>
    %11 = tpu.matmul %9, %10, %cst_8 {dimension_numbers = #tpu.dot_dimension_numbers<[1], [0], [0], [1], [0, 0, 1, 1], [], []>} : vector<8x512xbf16>, vector<512x256xbf16>, vector<8x256xf32> -> vector<8x256xf32>
    %c0_9 = arith.constant 0 : index
    %c0_10 = arith.constant 0 : index
    %12 = vector.load %arg5[%c0_9, %c0_10] : memref<1x256xf32, #tpu.memory_space<vmem>>, vector<1x256xf32>
    %13 = vector.broadcast %12 : vector<1x256xf32> to vector<8x256xf32>
    %14 = arith.addf %11, %13 : vector<8x256xf32>
    %cst_11 = arith.constant 0.000000e+00 : f32
    %15 = vector.broadcast %cst_11 : f32 to vector<8x256xf32>
    %16 = arith.maximumf %14, %15 : vector<8x256xf32>
    %17 = arith.truncf %16 : vector<8x256xf32> to vector<8x256xbf16>
    %c0_12 = arith.constant 0 : index
    %c0_13 = arith.constant 0 : index
    %18 = vector.load %arg6[%c0_12, %c0_13] : memref<256x64xbf16, #tpu.memory_space<vmem>>, vector<256x64xbf16>
    %cst_14 = arith.constant dense<0.000000e+00> : vector<8x64xf32>
    %19 = tpu.matmul %17, %18, %cst_14 {dimension_numbers = #tpu.dot_dimension_numbers<[1], [0], [0], [1], [0, 0, 1, 1], [], []>} : vector<8x256xbf16>, vector<256x64xbf16>, vector<8x64xf32> -> vector<8x64xf32>
    %c0_15 = arith.constant 0 : index
    %c0_16 = arith.constant 0 : index
    %20 = vector.load %arg7[%c0_15, %c0_16] : memref<1x64xf32, #tpu.memory_space<vmem>>, vector<1x64xf32>
    %21 = vector.broadcast %20 : vector<1x64xf32> to vector<8x64xf32>
    %22 = arith.addf %19, %21 : vector<8x64xf32>
    %cst_17 = arith.constant 0.000000e+00 : f32
    %23 = vector.broadcast %cst_17 : f32 to vector<8x64xf32>
    %24 = arith.maximumf %22, %23 : vector<8x64xf32>
    %25 = arith.truncf %24 : vector<8x64xf32> to vector<8x64xbf16>
    %c0_18 = arith.constant 0 : index
    %c0_19 = arith.constant 0 : index
    %26 = vector.load %arg8[%c0_18, %c0_19] : memref<64x16xbf16, #tpu.memory_space<vmem>>, vector<64x16xbf16>
    %cst_20 = arith.constant dense<0.000000e+00> : vector<8x16xf32>
    %27 = tpu.matmul %25, %26, %cst_20 {dimension_numbers = #tpu.dot_dimension_numbers<[1], [0], [0], [1], [0, 0, 1, 1], [], []>} : vector<8x64xbf16>, vector<64x16xbf16>, vector<8x16xf32> -> vector<8x16xf32>
    %c0_21 = arith.constant 0 : index
    %c0_22 = arith.constant 0 : index
    %28 = vector.load %arg9[%c0_21, %c0_22] : memref<1x16xf32, #tpu.memory_space<vmem>>, vector<1x16xf32>
    %29 = vector.broadcast %28 : vector<1x16xf32> to vector<8x16xf32>
    %30 = arith.addf %27, %29 : vector<8x16xf32>
    %cst_23 = arith.constant 0.000000e+00 : f32
    %31 = vector.broadcast %cst_23 : f32 to vector<8x16xf32>
    %32 = arith.maximumf %30, %31 : vector<8x16xf32>
    %33 = arith.truncf %32 : vector<8x16xf32> to vector<8x16xbf16>
    %c0_24 = arith.constant 0 : index
    %c0_25 = arith.constant 0 : index
    %34 = vector.load %arg10[%c0_24, %c0_25] : memref<16x128xbf16, #tpu.memory_space<vmem>>, vector<16x128xbf16>
    %cst_26 = arith.constant dense<0.000000e+00> : vector<8x128xf32>
    %35 = tpu.matmul %33, %34, %cst_26 {dimension_numbers = #tpu.dot_dimension_numbers<[1], [0], [0], [1], [0, 0, 1, 1], [], []>} : vector<8x16xbf16>, vector<16x128xbf16>, vector<8x128xf32> -> vector<8x128xf32>
    %c0_27 = arith.constant 0 : index
    %c0_28 = arith.constant 0 : index
    %36 = vector.load %arg11[%c0_27, %c0_28] : memref<1x128xf32, #tpu.memory_space<vmem>>, vector<1x128xf32>
    %37 = vector.broadcast %36 : vector<1x128xf32> to vector<8x128xf32>
    %38 = arith.addf %35, %37 : vector<8x128xf32>
    %39 = math.tanh %38 : vector<8x128xf32>
    %c0_29 = arith.constant 0 : index
    %c0_30 = arith.constant 0 : index
    %40 = vector.load %arg12[%c0_29, %c0_30] : memref<8x128xf32, #tpu.memory_space<vmem>>, vector<8x128xf32>
    tpu.vector_store %arg12[%c0_29, %c0_30], %39 {strides = array<i32>} : memref<8x128xf32, #tpu.memory_space<vmem>>, vector<8x128xf32>,
    return
  }
  func.func @transform_0(%arg0: i32) -> (i32, i32) {
    %c0_i32 = arith.constant 0 : i32
    %c0_i32_0 = arith.constant 0 : i32
    return %arg0, %c0_i32 : i32, i32
  }
  func.func @transform_1(%arg0: i32) -> (i32, i32) {
    %c0_i32 = arith.constant 0 : i32
    %c0_i32_0 = arith.constant 0 : i32
    %c0_i32_1 = arith.constant 0 : i32
    return %c0_i32, %c0_i32_0 : i32, i32
  }
  func.func @transform_2(%arg0: i32) -> (i32, i32) {
    %c0_i32 = arith.constant 0 : i32
    %c0_i32_0 = arith.constant 0 : i32
    %c0_i32_1 = arith.constant 0 : i32
    return %c0_i32, %c0_i32_0 : i32, i32
  }
  func.func @transform_3(%arg0: i32) -> (i32, i32) {
    %c0_i32 = arith.constant 0 : i32
    %c0_i32_0 = arith.constant 0 : i32
    %c0_i32_1 = arith.constant 0 : i32
    return %c0_i32, %c0_i32_0 : i32, i32
  }
  func.func @transform_4(%arg0: i32) -> (i32, i32) {
    %c0_i32 = arith.constant 0 : i32
    %c0_i32_0 = arith.constant 0 : i32
    %c0_i32_1 = arith.constant 0 : i32
    return %c0_i32, %c0_i32_0 : i32, i32
  }
  func.func @transform_5(%arg0: i32) -> (i32, i32) {
    %c0_i32 = arith.constant 0 : i32
    %c0_i32_0 = arith.constant 0 : i32
    %c0_i32_1 = arith.constant 0 : i32
    return %c0_i32, %c0_i32_0 : i32, i32
  }
  func.func @transform_6(%arg0: i32) -> (i32, i32) {
    %c0_i32 = arith.constant 0 : i32
    %c0_i32_0 = arith.constant 0 : i32
    %c0_i32_1 = arith.constant 0 : i32
    return %c0_i32, %c0_i32_0 : i32, i32
  }
  func.func @transform_7(%arg0: i32) -> (i32, i32) {
    %c0_i32 = arith.constant 0 : i32
    %c0_i32_0 = arith.constant 0 : i32
    %c0_i32_1 = arith.constant 0 : i32
    return %c0_i32, %c0_i32_0 : i32, i32
  }
  func.func @transform_8(%arg0: i32) -> (i32, i32) {
    %c0_i32 = arith.constant 0 : i32
    %c0_i32_0 = arith.constant 0 : i32
    %c0_i32_1 = arith.constant 0 : i32
    return %c0_i32, %c0_i32_0 : i32, i32
  }
  func.func @transform_9(%arg0: i32) -> (i32, i32) {
    %c0_i32 = arith.constant 0 : i32
    %c0_i32_0 = arith.constant 0 : i32
    %c0_i32_1 = arith.constant 0 : i32
    return %c0_i32, %c0_i32_0 : i32, i32
  }
  func.func @transform_10(%arg0: i32) -> (i32, i32) {
    %c0_i32 = arith.constant 0 : i32
    %c0_i32_0 = arith.constant 0 : i32
    %c0_i32_1 = arith.constant 0 : i32
    return %c0_i32, %c0_i32_0 : i32, i32
  }
  func.func @transform_11(%arg0: i32) -> (i32, i32) {
    %c0_i32 = arith.constant 0 : i32
    %c0_i32_0 = arith.constant 0 : i32
    return %arg0, %c0_i32 : i32, i32
  }
}

</mosaic_0001>

<llo_original>
// kernel: tpu_custom_call.1
$region0: #{tpu_custom_call.1}
  #allocation0 [shape = 'u32[]', space=smem, size = 0x4, offset = 0x4, fixed_abs, tag = 'smem constant byte address 0x4 - core index']
  #allocation1 [shape = 'u32[72,128]{1,0:T(1,128)}', space=vmem, size = 0x9000, scoped, tag = 'internal scratch']
  %s0 = inlined_call_operand.vmem [shape: f32[8,32], index: 0, kind: input, shape index: {}]
  %s1 = inlined_call_operand.vmem [shape: bf16[32,512], index: 1, kind: input, shape index: {}]
  %s2 = inlined_call_operand.vmem [shape: f32[1,512], index: 2, kind: input, shape index: {}]
  %s3 = inlined_call_operand.hbm [shape: bf16[512,256], index: 3, kind: input, shape index: {}]
  %s4 = inlined_call_operand.vmem [shape: f32[1,256], index: 4, kind: input, shape index: {}]
  %s5 = inlined_call_operand.vmem [shape: bf16[256,64], index: 5, kind: input, shape index: {}]
  %s6 = inlined_call_operand.vmem [shape: f32[1,64], index: 6, kind: input, shape index: {}]
  %s7 = inlined_call_operand.vmem [shape: bf16[64,16], index: 7, kind: input, shape index: {}]
  %s8 = inlined_call_operand.vmem [shape: f32[1,16], index: 8, kind: input, shape index: {}]
  %s9 = inlined_call_operand.vmem [shape: bf16[16,128], index: 9, kind: input, shape index: {}]
  %s10 = inlined_call_operand.vmem [shape: f32[1,128], index: 10, kind: input, shape index: {}]
  %s11 = inlined_call_operand.hbm [shape: f32[8,128], index: 11, kind: output, shape index: {}]
  %s12 = sld [smem:[#allocation0]]
  $region58: #{tpu_custom_call.1} parent=0
    _
  %s14 = ssub.s32 1, %s12
  %s15 = scalar_select 0, %s14, %s12
  $region1: #{tpu_custom_call.1} parent=0
    #allocation2 [shape = 'u8[262144]{0}', space=vmem, size = 0x40000, scoped, tag = 'input window, operand 3, single buffered']
    #allocation3 [shape = 's32[1]{0}', space=sflag, size = 0x4, scoped, tag = 'scoped memory for tpu_custom_call.1']
    #allocation4 [shape = 's32[1]{0}', space=sflag, size = 0x4, scoped, tag = 'scoped memory for tpu_custom_call.1']
    #allocation5 [shape = 'u8[4096]{0}', space=vmem, size = 0x1000, scoped, tag = 'output window, operand 0, single buffered']
    %16 = vsyncpa [#allocation3], 0
    %17 = vsyncpa [#allocation4], 0
    // Predicated region
    $region2: #{tpu_custom_call.1} parent=1 // pred_check
      _
    $region3: #{tpu_custom_call.1} parent=1 // pred_check_branch
      %19 = sbr.rel (0) target = $region5
    $region4: #{tpu_custom_call.1} parent=1 // pred_region
      _
    $region5: #{tpu_custom_call.1} parent=1 // pred_fallthru
      _
    // Predicated region
    $region6: #{tpu_custom_call.1} parent=1 // pred_check
      _
    $region7: #{tpu_custom_call.1} parent=1 // pred_check_branch
      %21 = sbr.rel (0) target = $region9
    $region8: #{tpu_custom_call.1} parent=1 // pred_region
      _
    $region9: #{tpu_custom_call.1} parent=1 // pred_fallthru
      _
    // Predicated region
    $region10: #{tpu_custom_call.1} parent=1 // pred_check
      _
    $region11: #{tpu_custom_call.1} parent=1 // pred_check_branch
      %23 = sbr.rel (0) target = $region13
    $region12: #{tpu_custom_call.1} parent=1 // pred_region
      _
    $region13: #{tpu_custom_call.1} parent=1 // pred_fallthru
      _
    // Predicated region
    $region14: #{tpu_custom_call.1} parent=1 // pred_check
      _
    $region15: #{tpu_custom_call.1} parent=1 // pred_check_branch
      %25 = sbr.rel (0) target = $region17
    $region16: #{tpu_custom_call.1} parent=1 // pred_region
      %27 = vsyncadd [#allocation3], 0
      %s28 = sshll.u32 %s3, 4
      %s29 = int_to_ptr.hbm [resolvable:$true] %s28
      %s30 = sshll.u32 [#allocation2], 4
      %s31 = int_to_ptr.vmem [resolvable:$true] %s30
      %36 = dma.hbm_to_vmem [thread:$0]  %s29, 8192, %s31, [#allocation3], 128, 128, 8
    $region17: #{tpu_custom_call.1} parent=1 // pred_fallthru
      _
    // Predicated region
    $region18: #{tpu_custom_call.1} parent=1 // pred_check
      _
    $region19: #{tpu_custom_call.1} parent=1 // pred_check_branch
      %38 = sbr.rel (0) target = $region21
    $region20: #{tpu_custom_call.1} parent=1 // pred_region
      _
    $region21: #{tpu_custom_call.1} parent=1 // pred_fallthru
      _
    // Predicated region
    $region22: #{tpu_custom_call.1} parent=1 // pred_check
      _
    $region23: #{tpu_custom_call.1} parent=1 // pred_check_branch
      %40 = sbr.rel (0) target = $region25
    $region24: #{tpu_custom_call.1} parent=1 // pred_region
      _
    $region25: #{tpu_custom_call.1} parent=1 // pred_fallthru
      _
    // Predicated region
    $region26: #{tpu_custom_call.1} parent=1 // pred_check
      _
    $region27: #{tpu_custom_call.1} parent=1 // pred_check_branch
      %42 = sbr.rel (0) target = $region29
    $region28: #{tpu_custom_call.1} parent=1 // pred_region
      _
    $region29: #{tpu_custom_call.1} parent=1 // pred_fallthru
      _
    // Predicated region
    $region30: #{tpu_custom_call.1} parent=1 // pred_check
      _
    $region31: #{tpu_custom_call.1} parent=1 // pred_check_branch
      %44 = sbr.rel (0) target = $region33
    $region32: #{tpu_custom_call.1} parent=1 // pred_region
      _
    $region33: #{tpu_custom_call.1} parent=1 // pred_fallthru
      _
    // Predicated region
    $region34: #{tpu_custom_call.1} parent=1 // pred_check
      _
    $region35: #{tpu_custom_call.1} parent=1 // pred_check_branch
      %46 = sbr.rel (0) target = $region37
    $region36: #{tpu_custom_call.1} parent=1 // pred_region
      _
    $region37: #{tpu_custom_call.1} parent=1 // pred_fallthru
      _
    // Predicated region
    $region38: #{tpu_custom_call.1} parent=1 // pred_check
      _
    $region39: #{tpu_custom_call.1} parent=1 // pred_check_branch
      %48 = sbr.rel (0) target = $region41
    $region40: #{tpu_custom_call.1} parent=1 // pred_region
      _
    $region41: #{tpu_custom_call.1} parent=1 // pred_fallthru
      _
    // Predicated region
    $region42: #{tpu_custom_call.1} parent=1 // pred_check
      _
    $region43: #{tpu_custom_call.1} parent=1 // pred_check_branch
      %50 = sbr.rel (0) target = $region45
    $region44: #{tpu_custom_call.1} parent=1 // pred_region
      _
    $region45: #{tpu_custom_call.1} parent=1 // pred_fallthru
      _
    // Predicated region
    $region46: #{tpu_custom_call.1} parent=1 // pred_check
      _
    $region47: #{tpu_custom_call.1} parent=1 // pred_check_branch
      %52 = sbr.rel (0) target = $region49
    $region48: #{tpu_custom_call.1} parent=1 // pred_region
      %54 = dma.done [#allocation3], 8192
    $region49: #{tpu_custom_call.1} parent=1 // pred_fallthru
      _
    %v56 = vld [vmem:[%s0] sm:$0xff]
    %v57 = vpack.c.bf16 %v56, %v56
    %v58 = vld [vmem:[%s1] sm:$0xff]
    %v59 = vld [vmem:[%s1 + $0x8] sm:$0xff]
    %v60 = vld [vmem:[%s1 + $0x10] sm:$0xff]
    %v61 = vld [vmem:[%s1 + $0x18] sm:$0xff]
    %v62 = vld [vmem:[%s1 + $0x20] sm:$0xff]
    %v63 = vld [vmem:[%s1 + $0x28] sm:$0xff]
    %v64 = vld [vmem:[%s1 + $0x30] sm:$0xff]
    %v65 = vld [vmem:[%s1 + $0x38] sm:$0xff]
    %v66 = vld [vmem:[%s2] sm:$0xf]
    %v68 = vperm.slane %v66, 0
    %v69 = vperm.slane %v66, 1
    %v70 = vperm.slane %v66, 2
    %v71 = vperm.slane %v66, 3
    %v84 = vunpack.c.l.b16 %v58
    %v85 = vunpack.c.h.b16 %v58
    %v86 = vunpack.c.l.b16 %v59
    %v87 = vunpack.c.h.b16 %v59
    %v88 = vunpack.c.l.b16 %v60
    %v89 = vunpack.c.h.b16 %v60
    %v90 = vunpack.c.l.b16 %v61
    %v91 = vunpack.c.h.b16 %v61
    %v92 = vunpack.c.l.b16 %v62
    %v93 = vunpack.c.h.b16 %v62
    %v94 = vunpack.c.l.b16 %v63
    %v95 = vunpack.c.h.b16 %v63
    %v96 = vunpack.c.l.b16 %v64
    %v97 = vunpack.c.h.b16 %v64
    %v98 = vunpack.c.l.b16 %v65
    %v99 = vunpack.c.h.b16 %v65
    %v100 = vpack.c.b16 %v88, %v84
    %v101 = vpack.c.b16 %v89, %v85
    %v102 = vpack.c.b16 %v90, %v86
    %v103 = vpack.c.b16 %v91, %v87
    %v104 = vpack.c.b16 %v96, %v92
    %v105 = vpack.c.b16 %v97, %v93
    %v106 = vpack.c.b16 %v98, %v94
    %v107 = vpack.c.b16 %v99, %v95
    %vm116 = vcmask 261120
    %v118 = vsel %vm116, %v57, 0
    %120 = vmatpush.bf16.msra.mxu0 0
    %121 = vmatpush.bf16.msra.mxu0 0
    %122 = vmatpush.bf16.msra.mxu0 0
    %123 = vmatpush.bf16.msra.mxu0 0
    %124 = vmatpush.bf16.msra.mxu0 0
    %125 = vmatpush.bf16.msra.mxu0 0
    %126 = vmatpush.bf16.msra.mxu0 %v104
    %127 = vmatpush.bf16.msra.mxu0 %v100
    %128 = vmatmul.bf16.gmra.mxu0 %v118
    %v129 = vpop.f32.mrf.mxu0
    %v130 = vadd.f32 %v68, %v129
    %v131 = vpop.f32.mrf.mxu0
    %132 = vdwg.mxu0
    %133 = vmatpush.bf16.msra.mxu0 0
    %134 = vmatpush.bf16.msra.mxu0 0
    %135 = vmatpush.bf16.msra.mxu0 0
    %136 = vmatpush.bf16.msra.mxu0 0
    %137 = vmatpush.bf16.msra.mxu0 0
    %138 = vmatpush.bf16.msra.mxu0 0
    %139 = vmatpush.bf16.msra.mxu0 %v105
    %140 = vmatpush.bf16.msra.mxu0 %v101
    %141 = vmatmul.bf16.gmra.mxu0 %v118
    %v142 = vpop.f32.mrf.mxu0
    %v143 = vadd.f32 %v69, %v142
    %v144 = vpop.f32.mrf.mxu0
    %145 = vdwg.mxu0
    %146 = vmatpush.bf16.msra.mxu0 0
    %147 = vmatpush.bf16.msra.mxu0 0
    %148 = vmatpush.bf16.msra.mxu0 0
    %149 = vmatpush.bf16.msra.mxu0 0
    %150 = vmatpush.bf16.msra.mxu0 0
    %151 = vmatpush.bf16.msra.mxu0 0
    %152 = vmatpush.bf16.msra.mxu0 %v106
    %153 = vmatpush.bf16.msra.mxu0 %v102
    %154 = vmatmul.bf16.gmra.mxu0 %v118
    %v155 = vpop.f32.mrf.mxu0
    %v156 = vadd.f32 %v70, %v155
    %v157 = vpop.f32.mrf.mxu0
    %158 = vdwg.mxu0
    %159 = vmatpush.bf16.msra.mxu0 0
    %160 = vmatpush.bf16.msra.mxu0 0
    %161 = vmatpush.bf16.msra.mxu0 0
    %162 = vmatpush.bf16.msra.mxu0 0
    %163 = vmatpush.bf16.msra.mxu0 0
    %164 = vmatpush.bf16.msra.mxu0 0
    %165 = vmatpush.bf16.msra.mxu0 %v107
    %166 = vmatpush.bf16.msra.mxu0 %v103
    %167 = vmatmul.bf16.gmra.mxu0 %v118
    %v168 = vpop.f32.mrf.mxu0
    %v169 = vadd.f32 %v71, %v168
    %v170 = vpop.f32.mrf.mxu0
    %171 = vdwg.mxu0
    %v172 = vmax.f32 %v130, 0.0
    %v173 = vmax.f32 %v143, 0.0
    %v174 = vmax.f32 %v156, 0.0
    %v175 = vmax.f32 %v169, 0.0
    %v176 = vpack.c.bf16 %v172, %v172
    %v177 = vpack.c.bf16 %v173, %v173
    %v178 = vpack.c.bf16 %v174, %v174
    %v179 = vpack.c.bf16 %v175, %v175
    %v180 = vld [vmem:[#allocation2] sm:$0xff]
    %v181 = vld [vmem:[#allocation2 + $0x8] sm:$0xff]
    %v182 = vld [vmem:[#allocation2 + $0x10] sm:$0xff]
    %v183 = vld [vmem:[#allocation2 + $0x18] sm:$0xff]
    %v184 = vld [vmem:[#allocation2 + $0x20] sm:$0xff]
    %v185 = vld [vmem:[#allocation2 + $0x28] sm:$0xff]
    %v186 = vld [vmem:[#allocation2 + $0x30] sm:$0xff]
    %v187 = vld [vmem:[#allocation2 + $0x38] sm:$0xff]
    %v188 = vld [vmem:[#allocation2 + $0x40] sm:$0xff]
    %v189 = vld [vmem:[#allocation2 + $0x48] sm:$0xff]
    %v190 = vld [vmem:[#allocation2 + $0x50] sm:$0xff]
    %v191 = vld [vmem:[#allocation2 + $0x58] sm:$0xff]
    %v192 = vld [vmem:[#allocation2 + $0x60] sm:$0xff]
    %v193 = vld [vmem:[#allocation2 + $0x68] sm:$0xff]
    %v194 = vld [vmem:[#allocation2 + $0x70] sm:$0xff]
    %v195 = vld [vmem:[#allocation2 + $0x78] sm:$0xff]
    %v196 = vld [vmem:[#allocation2 + $0x80] sm:$0xff]
    %v197 = vld [vmem:[#allocation2 + $0x88] sm:$0xff]
    %v198 = vld [vmem:[#allocation2 + $0x90] sm:$0xff]
    %v199 = vld [vmem:[#allocation2 + $0x98] sm:$0xff]
    %v200 = vld [vmem:[#allocation2 + $0xa0] sm:$0xff]
    %v201 = vld [vmem:[#allocation2 + $0xa8] sm:$0xff]
    %v202 = vld [vmem:[#allocation2 + $0xb0] sm:$0xff]
    %v203 = vld [vmem:[#allocation2 + $0xb8] sm:$0xff]
    %v204 = vld [vmem:[#allocation2 + $0xc0] sm:$0xff]
    %v205 = vld [vmem:[#allocation2 + $0xc8] sm:$0xff]
    %v206 = vld [vmem:[#allocation2 + $0xd0] sm:$0xff]
    %v207 = vld [vmem:[#allocation2 + $0xd8] sm:$0xff]
    %v208 = vld [vmem:[#allocation2 + $0xe0] sm:$0xff]
    %v209 = vld [vmem:[#allocation2 + $0xe8] sm:$0xff]
    %v210 = vld [vmem:[#allocation2 + $0xf0] sm:$0xff]
    %v211 = vld [vmem:[#allocation2 + $0xf8] sm:$0xff]
    %v212 = vld [vmem:[#allocation2 + $0x100] sm:$0xff]
    %v213 = vld [vmem:[#allocation2 + $0x108] sm:$0xff]
    %v214 = vld [vmem:[#allocation2 + $0x110] sm:$0xff]
    %v215 = vld [vmem:[#allocation2 + $0x118] sm:$0xff]
    %v216 = vld [vmem:[#allocation2 + $0x120] sm:$0xff]
    %v217 = vld [vmem:[#allocation2 + $0x128] sm:$0xff]
    %v218 = vld [vmem:[#allocation2 + $0x130] sm:$0xff]
    %v219 = vld [vmem:[#allocation2 + $0x138] sm:$0xff]
    %v220 = vld [vmem:[#allocation2 + $0x140] sm:$0xff]
    %v221 = vld [vmem:[#allocation2 + $0x148] sm:$0xff]
    %v222 = vld [vmem:[#allocation2 + $0x150] sm:$0xff]
    %v223 = vld [vmem:[#allocation2 + $0x158] sm:$0xff]
    %v224 = vld [vmem:[#allocation2 + $0x160] sm:$0xff]
    %v225 = vld [vmem:[#allocation2 + $0x168] sm:$0xff]
    %v226 = vld [vmem:[#allocation2 + $0x170] sm:$0xff]
    %v227 = vld [vmem:[#allocation2 + $0x178] sm:$0xff]
    %v228 = vld [vmem:[#allocation2 + $0x180] sm:$0xff]
    %v229 = vld [vmem:[#allocation2 + $0x188] sm:$0xff]
    %v230 = vld [vmem:[#allocation2 + $0x190] sm:$0xff]
    %v231 = vld [vmem:[#allocation2 + $0x198] sm:$0xff]
    %v232 = vld [vmem:[#allocation2 + $0x1a0] sm:$0xff]
    %v233 = vld [vmem:[#allocation2 + $0x1a8] sm:$0xff]
    %v234 = vld [vmem:[#allocation2 + $0x1b0] sm:$0xff]
    %v235 = vld [vmem:[#allocation2 + $0x1b8] sm:$0xff]
    %v236 = vld [vmem:[#allocation2 + $0x1c0] sm:$0xff]
    %v237 = vld [vmem:[#allocation2 + $0x1c8] sm:$0xff]
    %v238 = vld [vmem:[#allocation2 + $0x1d0] sm:$0xff]
    %v239 = vld [vmem:[#allocation2 + $0x1d8] sm:$0xff]
    %v240 = vld [vmem:[#allocation2 + $0x1e0] sm:$0xff]
    %v241 = vld [vmem:[#allocation2 + $0x1e8] sm:$0xff]
    %v242 = vld [vmem:[#allocation2 + $0x1f0] sm:$0xff]
    %v243 = vld [vmem:[#allocation2 + $0x1f8] sm:$0xff]
    %v244 = vld [vmem:[%s4] sm:$0x3]
    %v246 = vperm.slane %v244, 0
    %v247 = vperm.slane %v244, 1
    %v314 = vunpack.c.l.b16 %v180
    %v315 = vunpack.c.h.b16 %v180
    %v316 = vunpack.c.l.b16 %v181
    %v317 = vunpack.c.h.b16 %v181
    %v318 = vunpack.c.l.b16 %v182
    %v319 = vunpack.c.h.b16 %v182
    %v320 = vunpack.c.l.b16 %v183
    %v321 = vunpack.c.h.b16 %v183
    %v322 = vunpack.c.l.b16 %v184
    %v323 = vunpack.c.h.b16 %v184
    %v324 = vunpack.c.l.b16 %v185
    %v325 = vunpack.c.h.b16 %v185
    %v326 = vunpack.c.l.b16 %v186
    %v327 = vunpack.c.h.b16 %v186
    %v328 = vunpack.c.l.b16 %v187
    %v329 = vunpack.c.h.b16 %v187
    %v330 = vunpack.c.l.b16 %v188
    %v331 = vunpack.c.h.b16 %v188
    %v332 = vunpack.c.l.b16 %v189
    %v333 = vunpack.c.h.b16 %v189
    %v334 = vunpack.c.l.b16 %v190
    %v335 = vunpack.c.h.b16 %v190
    %v336 = vunpack.c.l.b16 %v191
    %v337 = vunpack.c.h.b16 %v191
    %v338 = vunpack.c.l.b16 %v192
    %v339 = vunpack.c.h.b16 %v192
    %v340 = vunpack.c.l.b16 %v193
    %v341 = vunpack.c.h.b16 %v193
    %v342 = vunpack.c.l.b16 %v194
    %v343 = vunpack.c.h.b16 %v194
    %v344 = vunpack.c.l.b16 %v195
    %v345 = vunpack.c.h.b16 %v195
    %v346 = vunpack.c.l.b16 %v196
    %v347 = vunpack.c.h.b16 %v196
    %v348 = vunpack.c.l.b16 %v197
    %v349 = vunpack.c.h.b16 %v197
    %v350 = vunpack.c.l.b16 %v198
    %v351 = vunpack.c.h.b16 %v198
    %v352 = vunpack.c.l.b16 %v199
    %v353 = vunpack.c.h.b16 %v199
    %v354 = vunpack.c.l.b16 %v200
    %v355 = vunpack.c.h.b16 %v200
    %v356 = vunpack.c.l.b16 %v201
    %v357 = vunpack.c.h.b16 %v201
    %v358 = vunpack.c.l.b16 %v202
    %v359 = vunpack.c.h.b16 %v202
    %v360 = vunpack.c.l.b16 %v203
    %v361 = vunpack.c.h.b16 %v203
    %v362 = vunpack.c.l.b16 %v204
    %v363 = vunpack.c.h.b16 %v204
    %v364 = vunpack.c.l.b16 %v205
    %v365 = vunpack.c.h.b16 %v205
    %v366 = vunpack.c.l.b16 %v206
    %v367 = vunpack.c.h.b16 %v206
    %v368 = vunpack.c.l.b16 %v207
    %v369 = vunpack.c.h.b16 %v207
    %v370 = vunpack.c.l.b16 %v208
    %v371 = vunpack.c.h.b16 %v208
    %v372 = vunpack.c.l.b16 %v209
    %v373 = vunpack.c.h.b16 %v209
    %v374 = vunpack.c.l.b16 %v210
    %v375 = vunpack.c.h.b16 %v210
    %v376 = vunpack.c.l.b16 %v211
    %v377 = vunpack.c.h.b16 %v211
    %v378 = vunpack.c.l.b16 %v212
    %v379 = vunpack.c.h.b16 %v212
    %v380 = vunpack.c.l.b16 %v213
    %v381 = vunpack.c.h.b16 %v213
    %v382 = vunpack.c.l.b16 %v214
    %v383 = vunpack.c.h.b16 %v214
    %v384 = vunpack.c.l.b16 %v215
    %v385 = vunpack.c.h.b16 %v215
    %v386 = vunpack.c.l.b16 %v216
    %v387 = vunpack.c.h.b16 %v216
    %v388 = vunpack.c.l.b16 %v217
    %v389 = vunpack.c.h.b16 %v217
    %v390 = vunpack.c.l.b16 %v218
    %v391 = vunpack.c.h.b16 %v218
    %v392 = vunpack.c.l.b16 %v219
    %v393 = vunpack.c.h.b16 %v219
    %v394 = vunpack.c.l.b16 %v220
    %v395 = vunpack.c.h.b16 %v220
    %v396 = vunpack.c.l.b16 %v221
    %v397 = vunpack.c.h.b16 %v221
    %v398 = vunpack.c.l.b16 %v222
    %v399 = vunpack.c.h.b16 %v222
    %v400 = vunpack.c.l.b16 %v223
    %v401 = vunpack.c.h.b16 %v223
    %v402 = vunpack.c.l.b16 %v224
    %v403 = vunpack.c.h.b16 %v224
    %v404 = vunpack.c.l.b16 %v225
    %v405 = vunpack.c.h.b16 %v225
    %v406 = vunpack.c.l.b16 %v226
    %v407 = vunpack.c.h.b16 %v226
    %v408 = vunpack.c.l.b16 %v227
    %v409 = vunpack.c.h.b16 %v227
    %v410 = vunpack.c.l.b16 %v228
    %v411 = vunpack.c.h.b16 %v228
    %v412 = vunpack.c.l.b16 %v229
    %v413 = vunpack.c.h.b16 %v229
    %v414 = vunpack.c.l.b16 %v230
    %v415 = vunpack.c.h.b16 %v230
    %v416 = vunpack.c.l.b16 %v231
    %v417 = vunpack.c.h.b16 %v231
    %v418 = vunpack.c.l.b16 %v232
    %v419 = vunpack.c.h.b16 %v232
    %v420 = vunpack.c.l.b16 %v233
    %v421 = vunpack.c.h.b16 %v233
    %v422 = vunpack.c.l.b16 %v234
    %v423 = vunpack.c.h.b16 %v234
    %v424 = vunpack.c.l.b16 %v235
    %v425 = vunpack.c.h.b16 %v235
    %v426 = vunpack.c.l.b16 %v236
    %v427 = vunpack.c.h.b16 %v236
    %v428 = vunpack.c.l.b16 %v237
    %v429 = vunpack.c.h.b16 %v237
    %v430 = vunpack.c.l.b16 %v238
    %v431 = vunpack.c.h.b16 %v238
    %v432 = vunpack.c.l.b16 %v239
    %v433 = vunpack.c.h.b16 %v239
    %v434 = vunpack.c.l.b16 %v240
    %v435 = vunpack.c.h.b16 %v240
    %v436 = vunpack.c.l.b16 %v241
    %v437 = vunpack.c.h.b16 %v241
    %v438 = vunpack.c.l.b16 %v242
    %v439 = vunpack.c.h.b16 %v242
    %v440 = vunpack.c.l.b16 %v243
    %v441 = vunpack.c.h.b16 %v243
    %v442 = vpack.c.b16 %v316, %v314
    %v443 = vpack.c.b16 %v317, %v315
    %v444 = vpack.c.b16 %v320, %v318
    %v445 = vpack.c.b16 %v321, %v319
    %v446 = vpack.c.b16 %v324, %v322
    %v447 = vpack.c.b16 %v325, %v323
    %v448 = vpack.c.b16 %v328, %v326
    %v449 = vpack.c.b16 %v329, %v327
    %v450 = vpack.c.b16 %v332, %v330
    %v451 = vpack.c.b16 %v333, %v331
    %v452 = vpack.c.b16 %v336, %v334
    %v453 = vpack.c.b16 %v337, %v335
    %v454 = vpack.c.b16 %v340, %v338
    %v455 = vpack.c.b16 %v341, %v339
    %v456 = vpack.c.b16 %v344, %v342
    %v457 = vpack.c.b16 %v345, %v343
    %v458 = vpack.c.b16 %v348, %v346
    %v459 = vpack.c.b16 %v349, %v347
    %v460 = vpack.c.b16 %v352, %v350
    %v461 = vpack.c.b16 %v353, %v351
    %v462 = vpack.c.b16 %v356, %v354
    %v463 = vpack.c.b16 %v357, %v355
    %v464 = vpack.c.b16 %v360, %v358
    %v465 = vpack.c.b16 %v361, %v359
    %v466 = vpack.c.b16 %v364, %v362
    %v467 = vpack.c.b16 %v365, %v363
    %v468 = vpack.c.b16 %v368, %v366
    %v469 = vpack.c.b16 %v369, %v367
    %v470 = vpack.c.b16 %v372, %v370
    %v471 = vpack.c.b16 %v373, %v371
    %v472 = vpack.c.b16 %v376, %v374
    %v473 = vpack.c.b16 %v377, %v375
    %v474 = vpack.c.b16 %v380, %v378
    %v475 = vpack.c.b16 %v381, %v379
    %v476 = vpack.c.b16 %v384, %v382
    %v477 = vpack.c.b16 %v385, %v383
    %v478 = vpack.c.b16 %v388, %v386
    %v479 = vpack.c.b16 %v389, %v387
    %v480 = vpack.c.b16 %v392, %v390
    %v481 = vpack.c.b16 %v393, %v391
    %v482 = vpack.c.b16 %v396, %v394
    %v483 = vpack.c.b16 %v397, %v395
    %v484 = vpack.c.b16 %v400, %v398
    %v485 = vpack.c.b16 %v401, %v399
    %v486 = vpack.c.b16 %v404, %v402
    %v487 = vpack.c.b16 %v405, %v403
    %v488 = vpack.c.b16 %v408, %v406
    %v489 = vpack.c.b16 %v409, %v407
    %v490 = vpack.c.b16 %v412, %v410
    %v491 = vpack.c.b16 %v413, %v411
    %v492 = vpack.c.b16 %v416, %v414
    %v493 = vpack.c.b16 %v417, %v415
    %v494 = vpack.c.b16 %v420, %v418
    %v495 = vpack.c.b16 %v421, %v419
    %v496 = vpack.c.b16 %v424, %v422
    %v497 = vpack.c.b16 %v425, %v423
    %v498 = vpack.c.b16 %v428, %v426
    %v499 = vpack.c.b16 %v429, %v427
    %v500 = vpack.c.b16 %v432, %v430
    %v501 = vpack.c.b16 %v433, %v431
    %v502 = vpack.c.b16 %v436, %v434
    %v503 = vpack.c.b16 %v437, %v435
    %v504 = vpack.c.b16 %v440, %v438
    %v505 = vpack.c.b16 %v441, %v439
    %570 = vmatpush.bf16.msra.mxu0 %v456
    %571 = vmatpush.bf16.msra.mxu0 %v454
    %572 = vmatpush.bf16.msra.mxu0 %v452
    %573 = vmatpush.bf16.msra.mxu0 %v450
    %574 = vmatpush.bf16.msra.mxu0 %v448
    %575 = vmatpush.bf16.msra.mxu0 %v446
    %576 = vmatpush.bf16.msra.mxu0 %v444
    %577 = vmatpush.bf16.msra.mxu0 %v442
    %578 = vmatmul.bf16.gmra.mxu0 %v176
    %v579 = vpop.f32.mrf.mxu0
    %v580 = vadd.f32 %v246, %v579
    %v581 = vpop.f32.mrf.mxu0
    %582 = vdwg.mxu0
    %583 = vmatpush.bf16.msra.mxu0 %v472
    %584 = vmatpush.bf16.msra.mxu0 %v470
    %585 = vmatpush.bf16.msra.mxu0 %v468
    %586 = vmatpush.bf16.msra.mxu0 %v466
    %587 = vmatpush.bf16.msra.mxu0 %v464
    %588 = vmatpush.bf16.msra.mxu0 %v462
    %589 = vmatpush.bf16.msra.mxu0 %v460
    %590 = vmatpush.bf16.msra.mxu0 %v458
    %591 = vmatmul.bf16.gmra.mxu0 %v177
    %v592 = vpop.f32.mrf.mxu0
    %v593 = vadd.f32 %v580, %v592
    %v594 = vpop.f32.mrf.mxu0
    %595 = vdwg.mxu0
    %596 = vmatpush.bf16.msra.mxu0 %v488
    %597 = vmatpush.bf16.msra.mxu0 %v486
    %598 = vmatpush.bf16.msra.mxu0 %v484
    %599 = vmatpush.bf16.msra.mxu0 %v482
    %600 = vmatpush.bf16.msra.mxu0 %v480
    %601 = vmatpush.bf16.msra.mxu0 %v478
    %602 = vmatpush.bf16.msra.mxu0 %v476
    %603 = vmatpush.bf16.msra.mxu0 %v474
    %604 = vmatmul.bf16.gmra.mxu0 %v178
    %v605 = vpop.f32.mrf.mxu0
    %v606 = vadd.f32 %v593, %v605
    %v607 = vpop.f32.mrf.mxu0
    %608 = vdwg.mxu0
    %609 = vmatpush.bf16.msra.mxu0 %v504
    %610 = vmatpush.bf16.msra.mxu0 %v502
    %611 = vmatpush.bf16.msra.mxu0 %v500
    %612 = vmatpush.bf16.msra.mxu0 %v498
    %613 = vmatpush.bf16.msra.mxu0 %v496
    %614 = vmatpush.bf16.msra.mxu0 %v494
    %615 = vmatpush.bf16.msra.mxu0 %v492
    %616 = vmatpush.bf16.msra.mxu0 %v490
    %617 = vmatmul.bf16.gmra.mxu0 %v179
    %v618 = vpop.f32.mrf.mxu0
    %v619 = vadd.f32 %v606, %v618
    %v620 = vpop.f32.mrf.mxu0
    %621 = vdwg.mxu0
    %622 = vmatpush.bf16.msra.mxu0 %v457
    %623 = vmatpush.bf16.msra.mxu0 %v455
    %624 = vmatpush.bf16.msra.mxu0 %v453
    %625 = vmatpush.bf16.msra.mxu0 %v451
    %626 = vmatpush.bf16.msra.mxu0 %v449
    %627 = vmatpush.bf16.msra.mxu0 %v447
    %628 = vmatpush.bf16.msra.mxu0 %v445
    %629 = vmatpush.bf16.msra.mxu0 %v443
    %630 = vmatmul.bf16.gmra.mxu0 %v176
    %v631 = vpop.f32.mrf.mxu0
    %v632 = vadd.f32 %v247, %v631
    %v633 = vpop.f32.mrf.mxu0
    %634 = vdwg.mxu0
    %635 = vmatpush.bf16.msra.mxu0 %v473
    %636 = vmatpush.bf16.msra.mxu0 %v471
    %637 = vmatpush.bf16.msra.mxu0 %v469
    %638 = vmatpush.bf16.msra.mxu0 %v467
    %639 = vmatpush.bf16.msra.mxu0 %v465
    %640 = vmatpush.bf16.msra.mxu0 %v463
    %641 = vmatpush.bf16.msra.mxu0 %v461
    %642 = vmatpush.bf16.msra.mxu0 %v459
    %643 = vmatmul.bf16.gmra.mxu0 %v177
    %v644 = vpop.f32.mrf.mxu0
    %v645 = vadd.f32 %v632, %v644
    %v646 = vpop.f32.mrf.mxu0
    %647 = vdwg.mxu0
    %648 = vmatpush.bf16.msra.mxu0 %v489
    %649 = vmatpush.bf16.msra.mxu0 %v487
    %650 = vmatpush.bf16.msra.mxu0 %v485
    %651 = vmatpush.bf16.msra.mxu0 %v483
    %652 = vmatpush.bf16.msra.mxu0 %v481
    %653 = vmatpush.bf16.msra.mxu0 %v479
    %654 = vmatpush.bf16.msra.mxu0 %v477
    %655 = vmatpush.bf16.msra.mxu0 %v475
    %656 = vmatmul.bf16.gmra.mxu0 %v178
    %v657 = vpop.f32.mrf.mxu0
    %v658 = vadd.f32 %v645, %v657
    %v659 = vpop.f32.mrf.mxu0
    %660 = vdwg.mxu0
    %661 = vmatpush.bf16.msra.mxu0 %v505
    %662 = vmatpush.bf16.msra.mxu0 %v503
    %663 = vmatpush.bf16.msra.mxu0 %v501
    %664 = vmatpush.bf16.msra.mxu0 %v499
    %665 = vmatpush.bf16.msra.mxu0 %v497
    %666 = vmatpush.bf16.msra.mxu0 %v495
    %667 = vmatpush.bf16.msra.mxu0 %v493
    %668 = vmatpush.bf16.msra.mxu0 %v491
    %669 = vmatmul.bf16.gmra.mxu0 %v179
    %v670 = vpop.f32.mrf.mxu0
    %v671 = vadd.f32 %v658, %v670
    %v672 = vpop.f32.mrf.mxu0
    %673 = vdwg.mxu0
    %v674 = vmax.f32 %v619, 0.0
    %v675 = vmax.f32 %v671, 0.0
    %v676 = vpack.c.bf16 %v674, %v674
    %v677 = vpack.c.bf16 %v675, %v675
    %v678 = vld [vmem:[%s5] sm:$0xf]
    %v679 = vld [vmem:[%s5 + $0x4] sm:$0xf]
    %v680 = vld [vmem:[%s5 + $0x8] sm:$0xf]
    %v681 = vld [vmem:[%s5 + $0xc] sm:$0xf]
    %v682 = vld [vmem:[%s5 + $0x10] sm:$0xf]
    %v683 = vld [vmem:[%s5 + $0x14] sm:$0xf]
    %v684 = vld [vmem:[%s5 + $0x18] sm:$0xf]
    %v685 = vld [vmem:[%s5 + $0x1c] sm:$0xf]
    %v686 = vld [vmem:[%s5 + $0x20] sm:$0xf]
    %v687 = vld [vmem:[%s5 + $0x24] sm:$0xf]
    %v688 = vld [vmem:[%s5 + $0x28] sm:$0xf]
    %v689 = vld [vmem:[%s5 + $0x2c] sm:$0xf]
    %v690 = vld [vmem:[%s5 + $0x30] sm:$0xf]
    %v691 = vld [vmem:[%s5 + $0x34] sm:$0xf]
    %v692 = vld [vmem:[%s5 + $0x38] sm:$0xf]
    %v693 = vld [vmem:[%s5 + $0x3c] sm:$0xf]
    %v694 = vld [vmem:[%s5 + $0x40] sm:$0xf]
    %v695 = vld [vmem:[%s5 + $0x44] sm:$0xf]
    %v696 = vld [vmem:[%s5 + $0x48] sm:$0xf]
    %v697 = vld [vmem:[%s5 + $0x4c] sm:$0xf]
    %v698 = vld [vmem:[%s5 + $0x50] sm:$0xf]
    %v699 = vld [vmem:[%s5 + $0x54] sm:$0xf]
    %v700 = vld [vmem:[%s5 + $0x58] sm:$0xf]
    %v701 = vld [vmem:[%s5 + $0x5c] sm:$0xf]
    %v702 = vld [vmem:[%s5 + $0x60] sm:$0xf]
    %v703 = vld [vmem:[%s5 + $0x64] sm:$0xf]
    %v704 = vld [vmem:[%s5 + $0x68] sm:$0xf]
    %v705 = vld [vmem:[%s5 + $0x6c] sm:$0xf]
    %v706 = vld [vmem:[%s5 + $0x70] sm:$0xf]
    %v707 = vld [vmem:[%s5 + $0x74] sm:$0xf]
    %v708 = vld [vmem:[%s5 + $0x78] sm:$0xf]
    %v709 = vld [vmem:[%s5 + $0x7c] sm:$0xf]
    %v710 = vld [vmem:[%s6] sm:$0x1]
    %v712 = vperm.slane %v710, 0
    %v746 = vunpack.c.l.b16 %v678
    %v747 = vunpack.c.l.b16 %v679
    %v748 = vunpack.c.l.b16 %v680
    %v749 = vunpack.c.l.b16 %v681
    %v750 = vunpack.c.l.b16 %v682
    %v751 = vunpack.c.l.b16 %v683
    %v752 = vunpack.c.l.b16 %v684
    %v753 = vunpack.c.l.b16 %v685
    %v754 = vunpack.c.l.b16 %v686
    %v755 = vunpack.c.l.b16 %v687
    %v756 = vunpack.c.l.b16 %v688
    %v757 = vunpack.c.l.b16 %v689
    %v758 = vunpack.c.l.b16 %v690
    %v759 = vunpack.c.l.b16 %v691
    %v760 = vunpack.c.l.b16 %v692
    %v761 = vunpack.c.l.b16 %v693
    %v762 = vunpack.c.l.b16 %v694
    %v763 = vunpack.c.l.b16 %v695
    %v764 = vunpack.c.l.b16 %v696
    %v765 = vunpack.c.l.b16 %v697
    %v766 = vunpack.c.l.b16 %v698
    %v767 = vunpack.c.l.b16 %v699
    %v768 = vunpack.c.l.b16 %v700
    %v769 = vunpack.c.l.b16 %v701
    %v770 = vunpack.c.l.b16 %v702
    %v771 = vunpack.c.l.b16 %v703
    %v772 = vunpack.c.l.b16 %v704
    %v773 = vunpack.c.l.b16 %v705
    %v774 = vunpack.c.l.b16 %v706
    %v775 = vunpack.c.l.b16 %v707
    %v776 = vunpack.c.l.b16 %v708
    %v777 = vunpack.c.l.b16 %v709
    %v778 = vpack.c.b16 %v747, %v746
    %v779 = vpack.c.b16 %v749, %v748
    %v780 = vpack.c.b16 %v751, %v750
    %v781 = vpack.c.b16 %v753, %v752
    %v782 = vpack.c.b16 %v755, %v754
    %v783 = vpack.c.b16 %v757, %v756
    %v784 = vpack.c.b16 %v759, %v758
    %v785 = vpack.c.b16 %v761, %v760
    %v786 = vpack.c.b16 %v763, %v762
    %v787 = vpack.c.b16 %v765, %v764
    %v788 = vpack.c.b16 %v767, %v766
    %v789 = vpack.c.b16 %v769, %v768
    %v790 = vpack.c.b16 %v771, %v770
    %v791 = vpack.c.b16 %v773, %v772
    %v792 = vpack.c.b16 %v775, %v774
    %v793 = vpack.c.b16 %v777, %v776
    %810 = vmatpush.bf16.msra.mxu0 %v785
    %811 = vmatpush.bf16.msra.mxu0 %v784
    %812 = vmatpush.bf16.msra.mxu0 %v783
    %813 = vmatpush.bf16.msra.mxu0 %v782
    %814 = vmatpush.bf16.msra.mxu0 %v781
    %815 = vmatpush.bf16.msra.mxu0 %v780
    %816 = vmatpush.bf16.msra.mxu0 %v779
    %817 = vmatpush.bf16.msra.mxu0 %v778
    %818 = vmatmul.bf16.gmra.mxu0 %v676
    %v819 = vpop.f32.mrf.mxu0
    %v820 = vadd.f32 %v712, %v819
    %v821 = vpop.f32.mrf.mxu0
    %822 = vdwg.mxu0
    %823 = vmatpush.bf16.msra.mxu0 %v793
    %824 = vmatpush.bf16.msra.mxu0 %v792
    %825 = vmatpush.bf16.msra.mxu0 %v791
    %826 = vmatpush.bf16.msra.mxu0 %v790
    %827 = vmatpush.bf16.msra.mxu0 %v789
    %828 = vmatpush.bf16.msra.mxu0 %v788
    %829 = vmatpush.bf16.msra.mxu0 %v787
    %830 = vmatpush.bf16.msra.mxu0 %v786
    %831 = vmatmul.bf16.gmra.mxu0 %v677
    %v832 = vpop.f32.mrf.mxu0
    %v833 = vadd.f32 %v820, %v832
    %v834 = vpop.f32.mrf.mxu0
    %835 = vdwg.mxu0
    %v836 = vmax.f32 %v833, 0.0
    %v837 = vpack.c.bf16 %v836, %v836
    %v838 = vld [vmem:[%s7] sm:$0xf]
    %v839 = vld [vmem:[%s7 + $0x4] sm:$0xf]
    %v840 = vld [vmem:[%s7 + $0x8] sm:$0xf]
    %v841 = vld [vmem:[%s7 + $0xc] sm:$0xf]
    %v842 = vld [vmem:[%s7 + $0x10] sm:$0xf]
    %v843 = vld [vmem:[%s7 + $0x14] sm:$0xf]
    %v844 = vld [vmem:[%s7 + $0x18] sm:$0xf]
    %v845 = vld [vmem:[%s7 + $0x1c] sm:$0xf]
    %v846 = vld [vmem:[%s8] sm:$0x1]
    %v848 = vperm.slane %v846, 0
    %v858 = vunpack.c.l.b16 %v838
    %v859 = vunpack.c.l.b16 %v839
    %v860 = vunpack.c.l.b16 %v840
    %v861 = vunpack.c.l.b16 %v841
    %v862 = vunpack.c.l.b16 %v842
    %v863 = vunpack.c.l.b16 %v843
    %v864 = vunpack.c.l.b16 %v844
    %v865 = vunpack.c.l.b16 %v845
    %v866 = vpack.c.b16 %v859, %v858
    %v867 = vpack.c.b16 %v861, %v860
    %v868 = vpack.c.b16 %v863, %v862
    %v869 = vpack.c.b16 %v865, %v864
    %vm874 = vcmask 523264
    %v876 = vsel %vm874, %v837, 0
    %878 = vmatpush.bf16.msra.mxu0 0
    %879 = vmatpush.bf16.msra.mxu0 0
    %880 = vmatpush.bf16.msra.mxu0 0
    %881 = vmatpush.bf16.msra.mxu0 0
    %882 = vmatpush.bf16.msra.mxu0 %v869
    %883 = vmatpush.bf16.msra.mxu0 %v868
    %884 = vmatpush.bf16.msra.mxu0 %v867
    %885 = vmatpush.bf16.msra.mxu0 %v866
    %886 = vmatmul.bf16.gmra.mxu0 %v876
    %v887 = vpop.f32.mrf.mxu0
    %v888 = vadd.f32 %v848, %v887
    %v889 = vpop.f32.mrf.mxu0
    %890 = vdwg.mxu0
    %v891 = vmax.f32 %v888, 0.0
    %v892 = vpack.c.bf16 %v891, %v891
    %v893 = vld [vmem:[%s9] sm:$0xf]
    %v894 = vld [vmem:[%s9 + $0x4] sm:$0xf]
    %v895 = vld [vmem:[%s10] sm:$0x1]
    %v897 = vperm.slane %v895, 0
    %v901 = vunpack.c.l.b16 %v893
    %v902 = vunpack.c.l.b16 %v894
    %v903 = vpack.c.b16 %v902, %v901
    %vm905 = vcmask 130048
    %v907 = vsel %vm905, %v892, 0
    %909 = vmatpush.bf16.msra.mxu0 0
    %910 = vmatpush.bf16.msra.mxu0 0
    %911 = vmatpush.bf16.msra.mxu0 0
    %912 = vmatpush.bf16.msra.mxu0 0
    %913 = vmatpush.bf16.msra.mxu0 0
    %914 = vmatpush.bf16.msra.mxu0 0
    %915 = vmatpush.bf16.msra.mxu0 0
    %916 = vmatpush.bf16.msra.mxu0 %v903
    %917 = vmatmul.bf16.gmra.mxu0 %v907
    %v918 = vpop.f32.mrf.mxu0
    %v919 = vadd.f32 %v897, %v918
    %v920 = vpop.f32.mrf.mxu0
    %921 = vdwg.mxu0
    %v922 = vtanh.pop %v919
    %923 = vst [vmem:[#allocation5] sm:$0xff] %v922
    // Predicated region
    $region50: #{tpu_custom_call.1} parent=1 // pred_check
      _
    $region51: #{tpu_custom_call.1} parent=1 // pred_check_branch
      %925 = sbr.rel (0) target = $region53
    $region52: #{tpu_custom_call.1} parent=1 // pred_region
      %927 = vsyncadd [#allocation4], 0
      %s929 = sshll.u32 [#allocation5], 4
      %s930 = int_to_ptr.vmem [resolvable:$true] %s929
      %s931 = sshll.u32 %s11, 4
      %s932 = int_to_ptr.hbm [resolvable:$true] %s931
      %934 = dma.vmem_to_hbm [thread:$0]  %s930, 128, %s932, [#allocation4]
    $region53: #{tpu_custom_call.1} parent=1 // pred_fallthru
      _
    // Predicated region
    $region54: #{tpu_custom_call.1} parent=1 // pred_check
      _
    $region55: #{tpu_custom_call.1} parent=1 // pred_check_branch
      %936 = sbr.rel (0) target = $region57
    $region56: #{tpu_custom_call.1} parent=1 // pred_region
      %938 = dma.done [#allocation4], 128
    $region57: #{tpu_custom_call.1} parent=1 // pred_fallthru
      _
    %939 = vsyncpa [#allocation3], 1
    %940 = vsyncpa [#allocation4], 1

</llo_original>
